<compile_context>
chip_gen: v6e
topology: v6e:2x2x1
jax: 0.10.0
libtpu: 0.0.40
codegen_flags: <defaults>
</compile_context>

<pallas_src>
import numpy as np
import jax
import jax.numpy as jnp
from jax.experimental import pallas as pl
from jax.experimental.pallas import tpu as pltpu

# ----------------------------- problem sizes -----------------------------
B = 2            # batch_size
L = 16           # max_len
D_INP = 32       # repr_dim of word_embs_in_context
PROJ_DIM = 32    # task_params['d_hid'] (conv out channels == classifier hidden)
CNN_CONTEXT = 1  # task_params['edgeprobe_cnn_context']
K = 1 + 2 * CNN_CONTEXT
T = 4            # num_targets
N_CLASSES = 3
CLF_IN = 4 * PROJ_DIM   # span1(start,end) + span2(start,end) == 128 -> full-lane contraction
LN_EPS = 1e-5
BL = B * L              # 32
BT = B * T              # 8
LANES = 128

assert T & (T - 1) == 0 and L & (L - 1) == 0, "power-of-two T/L assumed for shift-based index math"
LOG2_T = T.bit_length() - 1
LOG2_L = L.bit_length() - 1

# Weight-slab row layout (single lane-dense (SLAB_ROWS, 128) f32 VMEM input):
#   rows [0:96)   lanes [0:64)   merged conv weights (tap-major), rows 96:128 stay zero
#   rows [0:128)  lanes [64:96)  classifier W1 (un-split, full 128-row contraction)
#   rows [128:160) lanes [0:128) W2 zero-padded to 128 output lanes (lanes 0:3 real)
#   row 160 lanes[0:64) bconv | 161 lanes[0:32) b1 | 162 gamma | 163 beta | 164 lanes[0:3) b2
R_W2, R_BCONV, R_B1, R_GAMMA, R_BETA, R_B2 = 128, 160, 161, 162, 163, 164
SLAB_ROWS = 168


# ----------------------- single fused forward kernel -----------------------
def fused_edge_kernel(x_ref, w_ref, data_ref, logits_ref, loss_ref):
    x2d = x_ref[...]                                                  # (B*L, D_INP) = (32, 32)

    # ---- conv taps via sublane rolls (XLU slot) + batch-boundary masking; no pad scratch ----
    lrow = jnp.bitwise_and(
        jax.lax.broadcasted_iota(jnp.int32, (BL, 1), 0), L - 1)      # position within sequence
    left = jnp.where(lrow == 0, 0.0, pltpu.roll(x2d, shift=1, axis=0))           # x[l-1]
    right = jnp.where(lrow == L - 1, 0.0, pltpu.roll(x2d, shift=BL - 1, axis=0))  # x[l+1]
    # [left | center | right | zeros] -> lane-dense (32, 128) operand (full-128 contraction)
    x_shifted = jnp.concatenate(
        [left, x2d, right, jnp.zeros((BL, D_INP), jnp.float32)], axis=-1)

    # ---- both Conv1d projections as ONE aligned MXU matmul: (32,128) @ (128,64) ----
    conv = jnp.dot(x_shifted, w_ref[0:LANES, 0:2 * PROJ_DIM],
                   preferred_element_type=jnp.float32)
    conv = conv + w_ref[R_BCONV:R_BCONV + 1, 0:2 * PROJ_DIM]          # (32, 64): [proj1 | proj2]

    # ---- spans + labels arrive packed in one (B*T, 8) int32 block ----
    data = data_ref[...]
    spans = data[:, 0:4]                                              # cols: [s1, e1, s2, e2]
    labels = pltpu.bitcast(data, jnp.float32)[:, 4:4 + N_CLASSES]     # (B*T, 3) f32
    # valid mask is derived from span1 start only (matches the reference). Rows where span2
    # is -1 are zeroed SOLELY because `valid` is False there -> keep the `& valid` below.
    valid = spans[:, 0:1] != -1                                       # (B*T, 1) bool

    # ---- span-endpoint gather: block-diagonal one-hots over the flattened sequence ----
    riota = jax.lax.broadcasted_iota(jnp.int32, (BT, 1), 0)
    base = (riota >> LOG2_T) << LOG2_L                                # b * L
    col = jax.lax.broadcasted_iota(jnp.int32, (BT, BL), 1)

    parts = []
    for k, half in ((0, 0), (1, 0), (2, 1), (3, 1)):                  # endpoint -> proj half
        onehot = ((col == base + spans[:, k:k + 1]) & valid).astype(jnp.float32)  # (B*T, B*L)
        g = jnp.dot(onehot, conv, preferred_element_type=jnp.float32)             # (B*T, 64)
        parts.append(g[:, half * PROJ_DIM:(half + 1) * PROJ_DIM])
    emb = jnp.concatenate(parts, axis=-1)                             # (B*T, 128)

    # ---- Linear -> Tanh -> LayerNorm -> (Dropout: eval identity) -> Linear ----
    h = jnp.tanh(jnp.dot(emb, w_ref[0:CLF_IN, 2 * PROJ_DIM:3 * PROJ_DIM],
                         preferred_element_type=jnp.float32)
                 + w_ref[R_B1:R_B1 + 1, 0:PROJ_DIM])
    mu = jnp.mean(h, axis=-1, keepdims=True)
    var = jnp.mean((h - mu) ** 2, axis=-1, keepdims=True)
    hn = ((h - mu) * jax.lax.rsqrt(var + LN_EPS)
          * w_ref[R_GAMMA:R_GAMMA + 1, 0:PROJ_DIM] + w_ref[R_BETA:R_BETA + 1, 0:PROJ_DIM])
    logits_pad = (jnp.dot(hn, w_ref[R_W2:R_W2 + PROJ_DIM, :],
                          preferred_element_type=jnp.float32)
                  + w_ref[R_B2:R_B2 + 1, :])                          # (B*T, 128), lanes 0:3 real
    logits_ref[...] = logits_pad                                      # one unmasked lane-dense vst

    # ---- masked BCE-with-logits loss (numerically stable) ----
    xl = logits_pad[:, 0:N_CLASSES]
    bce = jnp.maximum(xl, 0.0) - xl * labels + jnp.log1p(jnp.exp(-jnp.abs(xl)))
    mf = valid.astype(jnp.float32)
    loss_ref[0, 0] = jnp.sum(bce * mf) / jnp.maximum(jnp.sum(mf) * N_CLASSES, 1.0)


# ------------------------ parameter re-packing (one-time) ------------------------
def prepare_params(params):
    """One-time packing of ALL weights/biases into a single lane-dense f32 slab."""
    (w_c1, b_c1, w_c2, b_c2, (w1, b1, ln_g, ln_b, w2, b2)) = params
    P = PROJ_DIM
    # Merge the two Conv1d projections along output channels, tap-major rows:
    #   [K, D_INP, 2P] -> [K*D_INP, 2P]   (matches in-kernel [left|center|right] lane order).
    wconv = jnp.concatenate([w_c1, w_c2], axis=-1).reshape(K * D_INP, 2 * P)   # (96, 64)
    bconv = jnp.concatenate([b_c1, b_c2], axis=-1)                             # (1, 64)
    slab = jnp.zeros((SLAB_ROWS, LANES), jnp.float32)
    slab = slab.at[0:K * D_INP, 0:2 * P].set(wconv)
    slab = slab.at[0:CLF_IN, 2 * P:3 * P].set(w1)                 # original, un-split W1
    slab = slab.at[R_W2:R_W2 + P, 0:N_CLASSES].set(w2)            # W2 padded to 128 lanes
    slab = slab.at[R_BCONV:R_BCONV + 1, 0:2 * P].set(bconv)
    slab = slab.at[R_B1:R_B1 + 1, 0:P].set(b1)
    slab = slab.at[R_GAMMA:R_GAMMA + 1, 0:P].set(ln_g)
    slab = slab.at[R_BETA:R_BETA + 1, 0:P].set(ln_b)
    slab = slab.at[R_B2:R_B2 + 1, 0:N_CLASSES].set(b2)
    return slab


# --------------------------- full forward (one pallas_call) ---------------------------
def edge_classifier_forward(batch, word_embs_in_context, sent_mask, slab):
    # sent_mask accepted for API parity; EndpointSpanExtractor("x,y") ignores sequence_mask
    # and Conv1d does not use it -> matches PyTorch semantics.
    del sent_mask
    span1s = batch["span1s"].astype(jnp.int32)
    span2s = batch["span2s"].astype(jnp.int32)
    has_labels = "labels" in batch
    labels = (batch["labels"].astype(jnp.float32) if has_labels
              else jnp.zeros((B, T, N_CLASSES), jnp.float32))

    # Pack spans + bitcast labels into ONE (B*T, 8) int32 block -> a single tiny DMA.
    data = jnp.concatenate(
        [span1s.reshape(BT, 2), span2s.reshape(BT, 2),
         jax.lax.bitcast_convert_type(labels.reshape(BT, N_CLASSES), jnp.int32),
         jnp.zeros((BT, 1), jnp.int32)], axis=-1)
    x2d = word_embs_in_context.reshape(BL, D_INP)

    vmem = pl.BlockSpec(memory_space=pltpu.MemorySpace.VMEM)
    smem = pl.BlockSpec(memory_space=pltpu.MemorySpace.SMEM)

    logits_pad, loss = pl.pallas_call(
        fused_edge_kernel,
        out_shape=(jax.ShapeDtypeStruct((BT, LANES), jnp.float32),   # lane-dense logits slab
                   jax.ShapeDtypeStruct((1, 1), jnp.float32)),       # masked BCE loss
        in_specs=[vmem, vmem, vmem],
        out_specs=(vmem, smem),
    )(x2d, slab, data)

    logits = logits_pad[:, :N_CLASSES].reshape(B, T, N_CLASSES)
    mask = batch["span1s"][:, :, 0] != -1
    n_targets = jnp.sum(mask)
    out = {
        "n_inputs": word_embs_in_context.shape[0],
        "mask": mask,
        "n_targets": n_targets,
        "n_exs": n_targets,
        "logits": logits,
        "probs": jax.nn.sigmoid(logits),   # get_predictions: 24 elems, free in the XLA wrapper
    }
    if has_labels:
        out["loss"] = loss[0, 0]
    # TODO(synk): task.mcc_scorer / acc_scorer / f1_scorer are stateful external metric
    # accumulators with no Pallas/JAX equivalent here.
    return out


# ------------------------------ pure-JAX reference ---------------------------------
def reference_logits(x, span1s, span2s, params):
    (w_c1, b_c1, w_c2, b_c2, (w1, b1, g, beta, w2, b2)) = params

    def conv(x, w, b):
        xp = jnp.pad(x, ((0, 0), (CNN_CONTEXT, CNN_CONTEXT), (0, 0)))
        acc = jnp.zeros((B, L, PROJ_DIM), jnp.float32)
        for j in range(K):
            acc = acc + jnp.einsum("bld,dh->blh", xp[:, j:j + L, :], w[j])
        return acc + b

    p1, p2 = conv(x, w_c1, b_c1), conv(x, w_c2, b_c2)
    mask = (span1s[:, :, 0] != -1)
    idx1 = jnp.where(mask[..., None], span1s, 0)
    idx2 = jnp.where(mask[..., None], span2s, 0)
    gather = jax.vmap(lambda seq, ids: seq[ids])               # [L,H], [T] -> [T,H]
    emb = jnp.concatenate(
        [gather(p1, idx1[:, :, 0]), gather(p1, idx1[:, :, 1]),
         gather(p2, idx2[:, :, 0]), gather(p2, idx2[:, :, 1])], axis=-1)
    emb = emb * mask[..., None].astype(jnp.float32)
    h = jnp.tanh(emb @ w1 + b1)
    mu = jnp.mean(h, axis=-1, keepdims=True)
    var = jnp.mean((h - mu) ** 2, axis=-1, keepdims=True)
    hn = (h - mu) * jax.lax.rsqrt(var + LN_EPS) * g + beta
    return hn @ w2 + b2


def reference_loss(logits, labels, mask):
    xl, y = logits, labels
    bce = jnp.maximum(xl, 0.0) - xl * y + jnp.log1p(jnp.exp(-jnp.abs(xl)))
    mf = mask[..., None].astype(jnp.float32)
    return jnp.sum(bce * mf) / jnp.maximum(jnp.sum(mf) * N_CLASSES, 1.0)


# --------------------------------- main ------------------------------------
if __name__ == "__main__":
    key = jax.random.PRNGKey(0)
    ks = jax.random.split(key, 12)

    # Deterministic synthetic parameters (shapes per EdgeClassifierModule.__init__;
    # Conv1d weight [out, in, k] stored transposed as [k, in, out]).
    w_c1 = jax.random.normal(ks[0], (K, D_INP, PROJ_DIM), jnp.float32) * 0.1
    b_c1 = jax.random.normal(ks[1], (1, PROJ_DIM), jnp.float32) * 0.1
    w_c2 = jax.random.normal(ks[2], (K, D_INP, PROJ_DIM), jnp.float32) * 0.1
    b_c2 = jax.random.normal(ks[3], (1, PROJ_DIM), jnp.float32) * 0.1
    w1 = jax.random.normal(ks[4], (CLF_IN, PROJ_DIM), jnp.float32) * 0.1
    b1 = jax.random.normal(ks[5], (1, PROJ_DIM), jnp.float32) * 0.1
    ln_g = jnp.ones((1, PROJ_DIM), jnp.float32)
    ln_b = jnp.zeros((1, PROJ_DIM), jnp.float32)
    w2 = jax.random.normal(ks[6], (PROJ_DIM, N_CLASSES), jnp.float32) * 0.1
    b2 = jax.random.normal(ks[7], (1, N_CLASSES), jnp.float32) * 0.1
    params = (w_c1, b_c1, w_c2, b_c2, (w1, b1, ln_g, ln_b, w2, b2))
    slab = prepare_params(params)              # one-time re-packing, outside the forward

    # Inputs.
    word_embs = jax.random.normal(ks[8], (B, L, D_INP), jnp.float32)
    sent_mask = jnp.ones((B, L, 1), jnp.float32)
    span1s = jnp.array(
        [[[0, 2], [3, 5], [7, 7], [-1, -1]],
         [[1, 4], [6, 9], [-1, -1], [-1, -1]]], dtype=jnp.int32)
    span2s = jnp.array(
        [[[2, 3], [5, 8], [10, 12], [-1, -1]],
         [[0, 1], [9, 15], [-1, -1], [-1, -1]]], dtype=jnp.int32)
    labels = (jax.random.uniform(ks[9], (B, T, N_CLASSES)) > 0.5).astype(jnp.float32)
    batch = {"span1s": span1s, "span2s": span2s, "labels": labels}

    out = edge_classifier_forward(batch, word_embs, sent_mask, slab)
    jax.block_until_ready(out["logits"])
    jax.block_until_ready(out["loss"])

    # preds: unbind to variable-length per-example arrays (host-side numpy).
    probs_np = np.asarray(out["probs"])
    mask_np = np.asarray(out["mask"])
    out["preds"] = [probs_np[i][mask_np[i]] for i in range(B)]

    # Validate the fused kernel path against the pure-JAX reference.
    ref_logits = reference_logits(word_embs, span1s, span2s, params)
    np.testing.assert_allclose(np.asarray(out["logits"]), np.asarray(ref_logits),
                               rtol=1e-4, atol=1e-4)
    np.testing.assert_allclose(probs_np, np.asarray(jax.nn.sigmoid(ref_logits)),
                               rtol=1e-4, atol=1e-4)
    ref_loss = reference_loss(ref_logits, labels, span1s[:, :, 0] != -1)
    np.testing.assert_allclose(float(out["loss"]), float(ref_loss), rtol=1e-4, atol=1e-4)
    assert int(out["n_targets"]) == int(mask_np.sum())
    assert np.isfinite(float(out["loss"]))

    print("KERNEL_OK")
</pallas_src>

<mosaic_0001>
module attributes {stable_mosaic.version = 11 : i64} {
  func.func @fused_edge_kernel(%arg0: memref<32x32xf32, #tpu.memory_space<vmem>>, %arg1: memref<168x128xf32, #tpu.memory_space<vmem>>, %arg2: memref<8x8xi32, #tpu.memory_space<vmem>>, %arg3: memref<8x128xf32, #tpu.memory_space<vmem>>, %arg4: memref<1x1xf32, #tpu.memory_space<smem>>) attributes {dimension_semantics = [], scalar_prefetch = 0 : i64, scratch_operands = 0 : i64, tpu.core_type = #tpu.core_type<tc>} {
    %c0 = arith.constant 0 : index
    %c0_0 = arith.constant 0 : index
    %0 = vector.load %arg0[%c0, %c0_0] : memref<32x32xf32, #tpu.memory_space<vmem>>, vector<32x32xf32>
    %1 = tpu.iota {dimensions = array<i32: 0>} : vector<32x1xi32>
    %c15_i32 = arith.constant 15 : i32
    %2 = vector.broadcast %c15_i32 : i32 to vector<32x1xi32>
    %3 = arith.andi %1, %2 : vector<32x1xi32>
    %c0_i32 = arith.constant 0 : i32
    %4 = vector.broadcast %c0_i32 : i32 to vector<32x1xi32>
    %5 = arith.cmpi eq, %3, %4 : vector<32x1xi32>
    %c1_i32 = arith.constant 1 : i32
    %6 = tpu.dynamic_rotate %0 by %c1_i32 dim 0 : vector<32x32xf32>, i32 -> vector<32x32xf32>
    %cst = arith.constant 0.000000e+00 : f32
    %7 = vector.shape_cast %5 : vector<32x1xi1> to vector<32x1xi1>
    %8 = vector.broadcast %7 : vector<32x1xi1> to vector<32x32xi1>
    %9 = vector.broadcast %cst : f32 to vector<32x32xf32>
    %10 = arith.select %8, %9, %6 : vector<32x32xi1>, vector<32x32xf32>
    %c15_i32_1 = arith.constant 15 : i32
    %11 = vector.broadcast %c15_i32_1 : i32 to vector<32x1xi32>
    %12 = arith.cmpi eq, %3, %11 : vector<32x1xi32>
    %c31_i32 = arith.constant 31 : i32
    %13 = tpu.dynamic_rotate %0 by %c31_i32 dim 0 : vector<32x32xf32>, i32 -> vector<32x32xf32>
    %cst_2 = arith.constant 0.000000e+00 : f32
    %14 = vector.shape_cast %12 : vector<32x1xi1> to vector<32x1xi1>
    %15 = vector.broadcast %14 : vector<32x1xi1> to vector<32x32xi1>
    %16 = vector.broadcast %cst_2 : f32 to vector<32x32xf32>
    %17 = arith.select %15, %16, %13 : vector<32x32xi1>, vector<32x32xf32>
    %cst_3 = arith.constant 0.000000e+00 : f32
    %18 = vector.broadcast %cst_3 : f32 to vector<32x32xf32>
    %19 = tpu.concatenate %10, %0, %17, %18 in 1 : vector<32x32xf32>, vector<32x32xf32>, vector<32x32xf32>, vector<32x32xf32> -> vector<32x128xf32>
    %c0_4 = arith.constant 0 : index
    %c0_5 = arith.constant 0 : index
    %20 = vector.load %arg1[%c0_4, %c0_5] : memref<168x128xf32, #tpu.memory_space<vmem>>, vector<128x64xf32>
    %cst_6 = arith.constant dense<0.000000e+00> : vector<32x64xf32>
    %21 = tpu.matmul %19, %20, %cst_6 {dimension_numbers = #tpu.dot_dimension_numbers<[1], [0], [0], [1], [0, 0, 1, 1], [], []>} : vector<32x128xf32>, vector<128x64xf32>, vector<32x64xf32> -> vector<32x64xf32>
    %c160 = arith.constant 160 : index
    %c0_7 = arith.constant 0 : index
    %22 = vector.load %arg1[%c160, %c0_7] : memref<168x128xf32, #tpu.memory_space<vmem>>, vector<1x64xf32>
    %23 = vector.broadcast %22 : vector<1x64xf32> to vector<32x64xf32>
    %24 = arith.addf %21, %23 : vector<32x64xf32>
    %c0_8 = arith.constant 0 : index
    %c0_9 = arith.constant 0 : index
    %25 = vector.load %arg2[%c0_8, %c0_9] : memref<8x8xi32, #tpu.memory_space<vmem>>, vector<8x8xi32>
    %26 = vector.extract_strided_slice %25 {offsets = [0, 0], sizes = [8, 4], strides = [1, 1]} : vector<8x8xi32> to vector<8x4xi32>
    %27 = tpu.bitcast %25 : vector<8x8xi32> -> vector<8x8xf32>
    %28 = vector.extract_strided_slice %27 {offsets = [0, 4], sizes = [8, 3], strides = [1, 1]} : vector<8x8xf32> to vector<8x3xf32>
    %29 = vector.extract_strided_slice %26 {offsets = [0, 0], sizes = [8, 1], strides = [1, 1]} : vector<8x4xi32> to vector<8x1xi32>
    %c-1_i32 = arith.constant -1 : i32
    %30 = vector.broadcast %c-1_i32 : i32 to vector<8x1xi32>
    %31 = arith.cmpi ne, %29, %30 : vector<8x1xi32>
    %32 = tpu.iota {dimensions = array<i32: 0>} : vector<8x1xi32>
    %c2_i32 = arith.constant 2 : i32
    %33 = vector.broadcast %c2_i32 : i32 to vector<8x1xi32>
    %34 = arith.shrsi %32, %33 : vector<8x1xi32>
    %c4_i32 = arith.constant 4 : i32
    %35 = vector.broadcast %c4_i32 : i32 to vector<8x1xi32>
    %36 = arith.shli %34, %35 : vector<8x1xi32>
    %37 = tpu.iota {dimensions = array<i32: 1>} : vector<8x32xi32>
    %38 = vector.extract_strided_slice %26 {offsets = [0, 0], sizes = [8, 1], strides = [1, 1]} : vector<8x4xi32> to vector<8x1xi32>
    %39 = arith.addi %36, %38 : vector<8x1xi32>
    %40 = vector.broadcast %39 : vector<8x1xi32> to vector<8x32xi32>
    %41 = arith.cmpi eq, %37, %40 : vector<8x32xi32>
    %42 = vector.broadcast %31 : vector<8x1xi1> to vector<8x32xi1>
    %43 = arith.andi %41, %42 : vector<8x32xi1>
    %44 = arith.extui %43 : vector<8x32xi1> to vector<8x32xi32>
    %45 = arith.sitofp %44 : vector<8x32xi32> to vector<8x32xf32>
    %cst_10 = arith.constant dense<0.000000e+00> : vector<8x64xf32>
    %46 = tpu.matmul %45, %24, %cst_10 {dimension_numbers = #tpu.dot_dimension_numbers<[1], [0], [0], [1], [0, 0, 1, 1], [], []>} : vector<8x32xf32>, vector<32x64xf32>, vector<8x64xf32> -> vector<8x64xf32>
    %47 = vector.extract_strided_slice %46 {offsets = [0, 0], sizes = [8, 32], strides = [1, 1]} : vector<8x64xf32> to vector<8x32xf32>
    %48 = vector.extract_strided_slice %26 {offsets = [0, 1], sizes = [8, 1], strides = [1, 1]} : vector<8x4xi32> to vector<8x1xi32>
    %49 = arith.addi %36, %48 : vector<8x1xi32>
    %50 = vector.broadcast %49 : vector<8x1xi32> to vector<8x32xi32>
    %51 = arith.cmpi eq, %37, %50 : vector<8x32xi32>
    %52 = vector.broadcast %31 : vector<8x1xi1> to vector<8x32xi1>
    %53 = arith.andi %51, %52 : vector<8x32xi1>
    %54 = arith.extui %53 : vector<8x32xi1> to vector<8x32xi32>
    %55 = arith.sitofp %54 : vector<8x32xi32> to vector<8x32xf32>
    %cst_11 = arith.constant dense<0.000000e+00> : vector<8x64xf32>
    %56 = tpu.matmul %55, %24, %cst_11 {dimension_numbers = #tpu.dot_dimension_numbers<[1], [0], [0], [1], [0, 0, 1, 1], [], []>} : vector<8x32xf32>, vector<32x64xf32>, vector<8x64xf32> -> vector<8x64xf32>
    %57 = vector.extract_strided_slice %56 {offsets = [0, 0], sizes = [8, 32], strides = [1, 1]} : vector<8x64xf32> to vector<8x32xf32>
    %58 = vector.extract_strided_slice %26 {offsets = [0, 2], sizes = [8, 1], strides = [1, 1]} : vector<8x4xi32> to vector<8x1xi32>
    %59 = arith.addi %36, %58 : vector<8x1xi32>
    %60 = vector.broadcast %59 : vector<8x1xi32> to vector<8x32xi32>
    %61 = arith.cmpi eq, %37, %60 : vector<8x32xi32>
    %62 = vector.broadcast %31 : vector<8x1xi1> to vector<8x32xi1>
    %63 = arith.andi %61, %62 : vector<8x32xi1>
    %64 = arith.extui %63 : vector<8x32xi1> to vector<8x32xi32>
    %65 = arith.sitofp %64 : vector<8x32xi32> to vector<8x32xf32>
    %cst_12 = arith.constant dense<0.000000e+00> : vector<8x64xf32>
    %66 = tpu.matmul %65, %24, %cst_12 {dimension_numbers = #tpu.dot_dimension_numbers<[1], [0], [0], [1], [0, 0, 1, 1], [], []>} : vector<8x32xf32>, vector<32x64xf32>, vector<8x64xf32> -> vector<8x64xf32>
    %67 = vector.extract_strided_slice %66 {offsets = [0, 32], sizes = [8, 32], strides = [1, 1]} : vector<8x64xf32> to vector<8x32xf32>
    %68 = vector.extract_strided_slice %26 {offsets = [0, 3], sizes = [8, 1], strides = [1, 1]} : vector<8x4xi32> to vector<8x1xi32>
    %69 = arith.addi %36, %68 : vector<8x1xi32>
    %70 = vector.broadcast %69 : vector<8x1xi32> to vector<8x32xi32>
    %71 = arith.cmpi eq, %37, %70 : vector<8x32xi32>
    %72 = vector.broadcast %31 : vector<8x1xi1> to vector<8x32xi1>
    %73 = arith.andi %71, %72 : vector<8x32xi1>
    %74 = arith.extui %73 : vector<8x32xi1> to vector<8x32xi32>
    %75 = arith.sitofp %74 : vector<8x32xi32> to vector<8x32xf32>
    %cst_13 = arith.constant dense<0.000000e+00> : vector<8x64xf32>
    %76 = tpu.matmul %75, %24, %cst_13 {dimension_numbers = #tpu.dot_dimension_numbers<[1], [0], [0], [1], [0, 0, 1, 1], [], []>} : vector<8x32xf32>, vector<32x64xf32>, vector<8x64xf32> -> vector<8x64xf32>
    %77 = vector.extract_strided_slice %76 {offsets = [0, 32], sizes = [8, 32], strides = [1, 1]} : vector<8x64xf32> to vector<8x32xf32>
    %78 = tpu.concatenate %47, %57, %67, %77 in 1 : vector<8x32xf32>, vector<8x32xf32>, vector<8x32xf32>, vector<8x32xf32> -> vector<8x128xf32>
    %c0_14 = arith.constant 0 : index
    %c64 = arith.constant 64 : index
    %79 = vector.load %arg1[%c0_14, %c64] : memref<168x128xf32, #tpu.memory_space<vmem>>, vector<128x32xf32>
    %cst_15 = arith.constant dense<0.000000e+00> : vector<8x32xf32>
    %80 = tpu.matmul %78, %79, %cst_15 {dimension_numbers = #tpu.dot_dimension_numbers<[1], [0], [0], [1], [0, 0, 1, 1], [], []>} : vector<8x128xf32>, vector<128x32xf32>, vector<8x32xf32> -> vector<8x32xf32>
    %c161 = arith.constant 161 : index
    %c0_16 = arith.constant 0 : index
    %81 = vector.load %arg1[%c161, %c0_16] : memref<168x128xf32, #tpu.memory_space<vmem>>, vector<1x32xf32>
    %82 = vector.broadcast %81 : vector<1x32xf32> to vector<8x32xf32>
    %83 = arith.addf %80, %82 : vector<8x32xf32>
    %84 = math.tanh %83 : vector<8x32xf32>
    %cst_17 = arith.constant dense<0.000000e+00> : vector<8xf32>
    %85 = vector.multi_reduction <add>, %84, %cst_17 [1] : vector<8x32xf32> to vector<8xf32>
    %86 = vector.shape_cast %85 : vector<8xf32> to vector<8x1xf32>
    %cst_18 = arith.constant 3.200000e+01 : f32
    %87 = vector.broadcast %cst_18 : f32 to vector<8x1xf32>
    %88 = arith.divf %86, %87 : vector<8x1xf32>
    %89 = vector.broadcast %88 : vector<8x1xf32> to vector<8x32xf32>
    %90 = arith.subf %84, %89 : vector<8x32xf32>
    %91 = arith.mulf %90, %90 : vector<8x32xf32>
    %cst_19 = arith.constant dense<0.000000e+00> : vector<8xf32>
    %92 = vector.multi_reduction <add>, %91, %cst_19 [1] : vector<8x32xf32> to vector<8xf32>
    %93 = vector.shape_cast %92 : vector<8xf32> to vector<8x1xf32>
    %cst_20 = arith.constant 3.200000e+01 : f32
    %94 = vector.broadcast %cst_20 : f32 to vector<8x1xf32>
    %95 = arith.divf %93, %94 : vector<8x1xf32>
    %96 = vector.broadcast %88 : vector<8x1xf32> to vector<8x32xf32>
    %97 = arith.subf %84, %96 : vector<8x32xf32>
    %cst_21 = arith.constant 9.99999974E-6 : f32
    %98 = vector.broadcast %cst_21 : f32 to vector<8x1xf32>
    %99 = arith.addf %95, %98 : vector<8x1xf32>
    %100 = math.rsqrt %99 : vector<8x1xf32>
    %101 = vector.broadcast %100 : vector<8x1xf32> to vector<8x32xf32>
    %102 = arith.mulf %97, %101 : vector<8x32xf32>
    %c162 = arith.constant 162 : index
    %c0_22 = arith.constant 0 : index
    %103 = vector.load %arg1[%c162, %c0_22] : memref<168x128xf32, #tpu.memory_space<vmem>>, vector<1x32xf32>
    %104 = vector.broadcast %103 : vector<1x32xf32> to vector<8x32xf32>
    %105 = arith.mulf %102, %104 : vector<8x32xf32>
    %c163 = arith.constant 163 : index
    %c0_23 = arith.constant 0 : index
    %106 = vector.load %arg1[%c163, %c0_23] : memref<168x128xf32, #tpu.memory_space<vmem>>, vector<1x32xf32>
    %107 = vector.broadcast %106 : vector<1x32xf32> to vector<8x32xf32>
    %108 = arith.addf %105, %107 : vector<8x32xf32>
    %c128 = arith.constant 128 : index
    %c0_24 = arith.constant 0 : index
    %109 = vector.load %arg1[%c128, %c0_24] : memref<168x128xf32, #tpu.memory_space<vmem>>, vector<32x128xf32>
    %cst_25 = arith.constant dense<0.000000e+00> : vector<8x128xf32>
    %110 = tpu.matmul %108, %109, %cst_25 {dimension_numbers = #tpu.dot_dimension_numbers<[1], [0], [0], [1], [0, 0, 1, 1], [], []>} : vector<8x32xf32>, vector<32x128xf32>, vector<8x128xf32> -> vector<8x128xf32>
    %c164 = arith.constant 164 : index
    %c0_26 = arith.constant 0 : index
    %111 = vector.load %arg1[%c164, %c0_26] : memref<168x128xf32, #tpu.memory_space<vmem>>, vector<1x128xf32>
    %112 = vector.broadcast %111 : vector<1x128xf32> to vector<8x128xf32>
    %113 = arith.addf %110, %112 : vector<8x128xf32>
    %c0_27 = arith.constant 0 : index
    %c0_28 = arith.constant 0 : index
    %114 = vector.load %arg3[%c0_27, %c0_28] : memref<8x128xf32, #tpu.memory_space<vmem>>, vector<8x128xf32>
    tpu.vector_store %arg3[%c0_27, %c0_28], %113 {strides = array<i32>} : memref<8x128xf32, #tpu.memory_space<vmem>>, vector<8x128xf32>,
    %115 = vector.extract_strided_slice %113 {offsets = [0, 0], sizes = [8, 3], strides = [1, 1]} : vector<8x128xf32> to vector<8x3xf32>
    %cst_29 = arith.constant 0.000000e+00 : f32
    %116 = vector.broadcast %cst_29 : f32 to vector<8x3xf32>
    %117 = arith.maximumf %115, %116 : vector<8x3xf32>
    %118 = arith.mulf %115, %28 : vector<8x3xf32>
    %119 = arith.subf %117, %118 : vector<8x3xf32>
    %120 = math.absf %115 : vector<8x3xf32>
    %cst_30 = arith.constant 0.000000e+00 : f32
    %121 = vector.broadcast %cst_30 : f32 to vector<8x3xf32>
    %122 = arith.subf %121, %120 : vector<8x3xf32>
    %123 = math.exp %122 : vector<8x3xf32>
    %124 = math.log1p %123 : vector<8x3xf32>
    %125 = arith.addf %119, %124 : vector<8x3xf32>
    %126 = arith.extui %31 : vector<8x1xi1> to vector<8x1xi32>
    %127 = arith.sitofp %126 : vector<8x1xi32> to vector<8x1xf32>
    %128 = vector.broadcast %127 : vector<8x1xf32> to vector<8x3xf32>
    %129 = arith.mulf %125, %128 : vector<8x3xf32>
    %130 = vector.shape_cast %129 : vector<8x3xf32> to vector<1x8x3xf32>
    %cst_31 = arith.constant dense<0.000000e+00> : vector<1xf32>
    %131 = vector.multi_reduction <add>, %130, %cst_31 [1, 2] : vector<1x8x3xf32> to vector<1xf32>
    %132 = vector.shape_cast %131 : vector<1xf32> to vector<1x1x1xf32>
    %133 = vector.extract %132[0, 0, 0] : f32 from vector<1x1x1xf32>
    %134 = vector.shape_cast %127 : vector<8x1xf32> to vector<1x8x1xf32>
    %cst_32 = arith.constant dense<0.000000e+00> : vector<1xf32>
    %135 = vector.multi_reduction <add>, %134, %cst_32 [1, 2] : vector<1x8x1xf32> to vector<1xf32>
    %136 = vector.shape_cast %135 : vector<1xf32> to vector<1x1x1xf32>
    %137 = vector.extract %136[0, 0, 0] : f32 from vector<1x1x1xf32>
    %cst_33 = arith.constant 3.000000e+00 : f32
    %138 = arith.mulf %137, %cst_33 : f32
    %cst_34 = arith.constant 1.000000e+00 : f32
    %139 = arith.maximumf %138, %cst_34 : f32
    %140 = arith.divf %133, %139 : f32
    %c0_35 = arith.constant 0 : index
    %c0_36 = arith.constant 0 : index
    %141 = memref.load %arg4[%c0_35, %c0_36] : memref<1x1xf32, #tpu.memory_space<smem>>
    memref.store %140, %arg4[%c0_35, %c0_36] : memref<1x1xf32, #tpu.memory_space<smem>>
    return
  }
}

</mosaic_0001>

<llo_original>
// kernel: tpu_custom_call.1
$region0: #{tpu_custom_call.1}
  #allocation0 [shape = 'u32[]', space=smem, size = 0x4, offset = 0x4, fixed_abs, tag = 'smem constant byte address 0x4 - core index']
  #allocation1 [shape = 'u32[144,128]{1,0:T(1,128)}', space=vmem, size = 0x12000, scoped, tag = 'internal scratch']
  %s0 = inlined_call_operand.hbm [shape: f32[32,32], index: 0, kind: input, shape index: {}]
  %s1 = inlined_call_operand.hbm [shape: f32[168,128], index: 1, kind: input, shape index: {}]
  %s2 = inlined_call_operand.hbm [shape: s32[8,8], index: 2, kind: input, shape index: {}]
  %s3 = inlined_call_operand.hbm [shape: f32[8,128], index: 3, kind: output, shape index: {0}]
  %s4 = inlined_call_operand.hbm [shape: f32[1,1], index: 4, kind: output, shape index: {1}]
  %5 = xla_tuple %s3, %s4
  %s6 = sld [smem:[#allocation0]]
  $region42: #{tpu_custom_call.1} parent=0
    _
  %s8 = ssub.s32 1, %s6
  %s9 = scalar_select 0, %s8, %s6
  $region1: #{tpu_custom_call.1} parent=0
    #allocation2 [shape = 'u8[16384]{0}', space=vmem, size = 0x4000, scoped, tag = 'input window, operand 0, single buffered']
    #allocation3 [shape = 's32[1]{0}', space=sflag, size = 0x4, scoped, tag = 'scoped memory for tpu_custom_call.1']
    #allocation4 [shape = 's32[1]{0}', space=sflag, size = 0x4, scoped, tag = 'scoped memory for tpu_custom_call.1']
    #allocation5 [shape = 's32[1]{0}', space=sflag, size = 0x4, scoped, tag = 'scoped memory for tpu_custom_call.1']
    #allocation6 [shape = 'u8[86016]{0}', space=vmem, size = 0x15000, scoped, tag = 'input window, operand 1, single buffered']
    #allocation7 [shape = 's32[1]{0}', space=sflag, size = 0x4, scoped, tag = 'scoped memory for tpu_custom_call.1']
    #allocation8 [shape = 'u8[4096]{0}', space=vmem, size = 0x1000, scoped, tag = 'input window, operand 2, single buffered']
    #allocation9 [shape = 'u8[4096]{0}', space=vmem, size = 0x1000, scoped, tag = 'output window, operand 0, single buffered']
    #allocation10 [shape = 'u8[512]{0}', space=smem, size = 0x200, scoped, tag = 'output window, operand 1, single buffered']
    %10 = vsyncpa [#allocation3], 0
    %11 = vsyncpa [#allocation7], 0
    %12 = vsyncpa [#allocation4], 0
    %13 = vsyncpa [#allocation5], 0
    // Predicated region
    $region2: #{tpu_custom_call.1} parent=1 // pred_check
      _
    $region3: #{tpu_custom_call.1} parent=1 // pred_check_branch
      %15 = sbr.rel (0) target = $region5
    $region4: #{tpu_custom_call.1} parent=1 // pred_region
      %s17 = ssub.s32 512, 512
      %18 = vsyncadd [#allocation3], %s17
      %s19 = sshll.u32 [#allocation2], 4
      %s20 = int_to_ptr.vmem [resolvable:$true] %s19
      %25 = dma.hbm_to_vmem [thread:$0]  %s0, 512, %s20, [#allocation3], 128, 128, 8
    $region5: #{tpu_custom_call.1} parent=1 // pred_fallthru
      _
    // Predicated region
    $region6: #{tpu_custom_call.1} parent=1 // pred_check
      _
    $region7: #{tpu_custom_call.1} parent=1 // pred_check_branch
      %27 = sbr.rel (0) target = $region9
    $region8: #{tpu_custom_call.1} parent=1 // pred_region
      %s29 = ssub.s32 2688, 2688
      %30 = vsyncadd [#allocation7], %s29
      %s31 = sshll.u32 [#allocation6], 4
      %s32 = int_to_ptr.vmem [resolvable:$true] %s31
      %37 = dma.hbm_to_vmem [thread:$0]  %s1, 2688, %s32, [#allocation7], 128, 128, 8
    $region9: #{tpu_custom_call.1} parent=1 // pred_fallthru
      _
    // Predicated region
    $region10: #{tpu_custom_call.1} parent=1 // pred_check
      _
    $region11: #{tpu_custom_call.1} parent=1 // pred_check_branch
      %39 = sbr.rel (0) target = $region13
    $region12: #{tpu_custom_call.1} parent=1 // pred_region
      %s41 = ssub.s32 128, 128
      %42 = vsyncadd [#allocation7], %s41
      %s44 = sshll.u32 [#allocation8], 4
      %s45 = int_to_ptr.vmem [resolvable:$true] %s44
      %47 = dma.hbm_to_vmem [thread:$0]  %s2, 128, %s45, [#allocation7]
    $region13: #{tpu_custom_call.1} parent=1 // pred_fallthru
      _
    // Predicated region
    $region14: #{tpu_custom_call.1} parent=1 // pred_check
      _
    $region15: #{tpu_custom_call.1} parent=1 // pred_check_branch
      %49 = sbr.rel (0) target = $region17
    $region16: #{tpu_custom_call.1} parent=1 // pred_region
      %50 = dma.done [#allocation3], 512
    $region17: #{tpu_custom_call.1} parent=1 // pred_fallthru
      _
    // Predicated region
    $region18: #{tpu_custom_call.1} parent=1 // pred_check
      _
    $region19: #{tpu_custom_call.1} parent=1 // pred_check_branch
      %52 = sbr.rel (0) target = $region21
    $region20: #{tpu_custom_call.1} parent=1 // pred_region
      %53 = dma.done [#allocation7], 2688
    $region21: #{tpu_custom_call.1} parent=1 // pred_fallthru
      _
    // Predicated region
    $region22: #{tpu_custom_call.1} parent=1 // pred_check
      _
    $region23: #{tpu_custom_call.1} parent=1 // pred_check_branch
      %55 = sbr.rel (0) target = $region25
    $region24: #{tpu_custom_call.1} parent=1 // pred_region
      %56 = dma.done [#allocation7], 128
    $region25: #{tpu_custom_call.1} parent=1 // pred_fallthru
      _
    %v57 = vld [vmem:[#allocation2] sm:$0xff]
    %v58 = vld [vmem:[#allocation2 + $0x8] sm:$0xff]
    %v59 = vld [vmem:[#allocation2 + $0x10] sm:$0xff]
    %v60 = vld [vmem:[#allocation2 + $0x18] sm:$0xff]
    %v61 = vlaneseq
    %v62 = vshrl.u32 %v61, 7
    %v63 = vadd.s32 %v62, 8
    %v64 = vadd.s32 %v62, 16
    %v65 = vadd.s32 %v62, 24
    %v66 = vand.u32 %v62, 15
    %v67 = vand.u32 %v63, 15
    %v68 = vand.u32 %v64, 15
    %v69 = vand.u32 %v65, 15
    %vm70 = vcmp.eq.s32.totalorder %v66, 0
    %vm71 = vcmp.eq.s32.totalorder %v67, 0
    %vm72 = vcmp.eq.s32.totalorder %v68, 0
    %vm73 = vcmp.eq.s32.totalorder %v69, 0
    %v74 = vrot.slane %v57, 7
    %v75 = vrot.slane %v58, 7
    %v76 = vrot.slane %v59, 7
    %v77 = vrot.slane %v60, 7
    %vm78 = vcmp.lt.s32.totalorder %v62, 1
    %v79 = vsel %vm78, %v76, %v77
    %v80 = vsel %vm78, %v75, %v76
    %v81 = vsel %vm78, %v74, %v75
    %v82 = vsel %vm78, %v77, %v74
    %v83 = vsel %vm70, 1, 0
    %v84 = vsel %vm71, 1, 0
    %v85 = vsel %vm72, 1, 0
    %v86 = vsel %vm73, 1, 0
    %vm87 = vcmp.eq.s32.totalorder %v83, 1
    %vm88 = vcmp.eq.s32.totalorder %v84, 1
    %vm89 = vcmp.eq.s32.totalorder %v85, 1
    %vm90 = vcmp.eq.s32.totalorder %v86, 1
    %v91 = vsel %vm87, 0.0, %v82
    %v92 = vsel %vm88, 0.0, %v81
    %v93 = vsel %vm89, 0.0, %v80
    %v94 = vsel %vm90, 0.0, %v79
    %vm95 = vcmp.eq.s32.totalorder %v66, 15
    %vm96 = vcmp.eq.s32.totalorder %v67, 15
    %vm97 = vcmp.eq.s32.totalorder %v68, 15
    %vm98 = vcmp.eq.s32.totalorder %v69, 15
    %v99 = vrot.slane %v57, 1
    %v100 = vrot.slane %v58, 1
    %v101 = vrot.slane %v59, 1
    %v102 = vrot.slane %v60, 1
    %vm103 = vcmp.lt.s32.totalorder %v62, 7
    %v104 = vsel %vm103, %v101, %v102
    %v105 = vsel %vm103, %v100, %v101
    %v106 = vsel %vm103, %v99, %v100
    %v107 = vsel %vm103, %v102, %v99
    %v108 = vsel %vm95, 1, 0
    %v109 = vsel %vm96, 1, 0
    %v110 = vsel %vm97, 1, 0
    %v111 = vsel %vm98, 1, 0
    %vm112 = vcmp.eq.s32.totalorder %v108, 1
    %vm113 = vcmp.eq.s32.totalorder %v109, 1
    %vm114 = vcmp.eq.s32.totalorder %v110, 1
    %vm115 = vcmp.eq.s32.totalorder %v111, 1
    %v116 = vsel %vm112, 0.0, %v106
    %v117 = vsel %vm113, 0.0, %v105
    %v118 = vsel %vm114, 0.0, %v104
    %v119 = vsel %vm115, 0.0, %v107
    %124 = vrot.lane.b32.xlu0 %v57, 32
    %v125 = vpop.permute.xlu0 %124
    %126 = vrot.lane.b32.xlu0 %v58, 32
    %v127 = vpop.permute.xlu0 %126
    %128 = vrot.lane.b32.xlu0 %v59, 32
    %v129 = vpop.permute.xlu0 %128
    %130 = vrot.lane.b32.xlu0 %v60, 32
    %v131 = vpop.permute.xlu0 %130
    %140 = vrot.lane.b32.xlu0 %v116, 64
    %v141 = vpop.permute.xlu0 %140
    %142 = vrot.lane.b32.xlu0 %v117, 64
    %v143 = vpop.permute.xlu0 %142
    %144 = vrot.lane.b32.xlu0 %v118, 64
    %v145 = vpop.permute.xlu0 %144
    %146 = vrot.lane.b32.xlu0 %v119, 64
    %v147 = vpop.permute.xlu0 %146
    %vm152 = vcmask 261120
    %v153 = vsel %vm152, %v91, %v125
    %v154 = vsel %vm152, %v92, %v127
    %v155 = vsel %vm152, %v93, %v129
    %v156 = vsel %vm152, %v94, %v131
    %vm157 = vcmask 523264
    %v158 = vsel %vm157, %v153, %v141
    %v159 = vsel %vm157, %v154, %v143
    %v160 = vsel %vm157, %v155, %v145
    %v161 = vsel %vm157, %v156, %v147
    %vm162 = vcmask 785408
    %v163 = vsel %vm162, %v158, 0.0
    %v164 = vsel %vm162, %v159, 0.0
    %v165 = vsel %vm162, %v160, 0.0
    %v166 = vsel %vm162, %v161, 0.0
    %v167 = vld [vmem:[#allocation6] sm:$0xff]
    %v168 = vld [vmem:[#allocation6 + $0x8] sm:$0xff]
    %v169 = vld [vmem:[#allocation6 + $0x10] sm:$0xff]
    %v170 = vld [vmem:[#allocation6 + $0x18] sm:$0xff]
    %v171 = vld [vmem:[#allocation6 + $0x20] sm:$0xff]
    %v172 = vld [vmem:[#allocation6 + $0x28] sm:$0xff]
    %v173 = vld [vmem:[#allocation6 + $0x30] sm:$0xff]
    %v174 = vld [vmem:[#allocation6 + $0x38] sm:$0xff]
    %v175 = vld [vmem:[#allocation6 + $0x40] sm:$0xff]
    %v176 = vld [vmem:[#allocation6 + $0x48] sm:$0xff]
    %v177 = vld [vmem:[#allocation6 + $0x50] sm:$0xff]
    %v178 = vld [vmem:[#allocation6 + $0x58] sm:$0xff]
    %v179 = vld [vmem:[#allocation6 + $0x60] sm:$0xff]
    %v180 = vld [vmem:[#allocation6 + $0x68] sm:$0xff]
    %v181 = vld [vmem:[#allocation6 + $0x70] sm:$0xff]
    %v182 = vld [vmem:[#allocation6 + $0x78] sm:$0xff]
    %v183 = vld [vmem:[#allocation6 + $0xa0] sm:$0x1]
    %v184 = vlaneseq
    %v185 = vshrl.u32 %v184, 7
    %v186 = vsub.s32 0, %v185
    %v187 = vrot.slane %v183, %v186
    %188 = vmatprep.subr.mxu0 0.0
    %189 = vmatpush1.msra.mxu0 %v182
    %190 = vmatprep.subr.mxu0 0.0
    %191 = vmatpush1.msra.mxu0 %v181
    %192 = vmatprep.subr.mxu0 0.0
    %193 = vmatpush1.msra.mxu0 %v180
    %194 = vmatprep.subr.mxu0 0.0
    %195 = vmatpush1.msra.mxu0 %v179
    %196 = vmatprep.subr.mxu0 0.0
    %197 = vmatpush1.msra.mxu0 %v178
    %198 = vmatprep.subr.mxu0 0.0
    %199 = vmatpush1.msra.mxu0 %v177
    %200 = vmatprep.subr.mxu0 0.0
    %201 = vmatpush1.msra.mxu0 %v176
    %202 = vmatprep.subr.mxu0 0.0
    %203 = vmatpush1.msra.mxu0 %v175
    %204 = vmatprep.subr.mxu0 0.0
    %205 = vmatpush1.msra.mxu0 %v174
    %206 = vmatprep.subr.mxu0 0.0
    %207 = vmatpush1.msra.mxu0 %v173
    %208 = vmatprep.subr.mxu0 0.0
    %209 = vmatpush1.msra.mxu0 %v172
    %210 = vmatprep.subr.mxu0 0.0
    %211 = vmatpush1.msra.mxu0 %v171
    %212 = vmatprep.subr.mxu0 0.0
    %213 = vmatpush1.msra.mxu0 %v170
    %214 = vmatprep.subr.mxu0 0.0
    %215 = vmatpush1.msra.mxu0 %v169
    %216 = vmatprep.subr.mxu0 0.0
    %217 = vmatpush1.msra.mxu0 %v168
    %218 = vmatprep.subr.mxu0 0.0
    %219 = vmatpush1.msra.mxu0 %v167
    %220 = vmatprep.subr.mxu0 0.0
    %221 = vmatpush2.msra.mxu0 0.0
    %222 = vmatprep.subr.mxu0 0.0
    %223 = vmatpush2.msra.mxu0 0.0
    %224 = vmatprep.subr.mxu0 0.0
    %225 = vmatpush2.msra.mxu0 0.0
    %226 = vmatprep.subr.mxu0 0.0
    %227 = vmatpush2.msra.mxu0 0.0
    %228 = vmatprep.subr.mxu0 0.0
    %229 = vmatpush2.msra.mxu0 0.0
    %230 = vmatprep.subr.mxu0 0.0
    %231 = vmatpush2.msra.mxu0 0.0
    %232 = vmatprep.subr.mxu0 0.0
    %233 = vmatpush2.msra.mxu0 0.0
    %234 = vmatprep.subr.mxu0 0.0
    %235 = vmatpush2.msra.mxu0 0.0
    %236 = vmatprep.subr.mxu0 0.0
    %237 = vmatpush2.msra.mxu0 0.0
    %238 = vmatprep.subr.mxu0 0.0
    %239 = vmatpush2.msra.mxu0 0.0
    %240 = vmatprep.subr.mxu0 0.0
    %241 = vmatpush2.msra.mxu0 0.0
    %242 = vmatprep.subr.mxu0 0.0
    %243 = vmatpush2.msra.mxu0 0.0
    %244 = vmatprep.subr.mxu0 0.0
    %245 = vmatpush2.msra.mxu0 0.0
    %246 = vmatprep.subr.mxu0 0.0
    %247 = vmatpush2.msra.mxu0 0.0
    %248 = vmatprep.subr.mxu0 0.0
    %249 = vmatpush2.msra.mxu0 0.0
    %250 = vmatprep.subr.mxu0 0.0
    %251 = vmatpush2.msra.mxu0 0.0
    %252 = vmatprep.mubr.f32.mxu0 0.0
    %253 = vmatmul.mubr.f32.gmra.mxu0 %v163
    %v254 = vpop.f32.mrf.mxu0
    %v255 = vadd.f32 %v187, %v254
    %v256 = vpop.f32.mrf.mxu0
    %257 = vmatprep.mubr.f32.mxu0 0.0
    %258 = vmatmul.mubr.f32.gmra.mxu0 %v164
    %v259 = vpop.f32.mrf.mxu0
    %v260 = vadd.f32 %v187, %v259
    %v261 = vpop.f32.mrf.mxu0
    %262 = vmatprep.mubr.f32.mxu0 0.0
    %263 = vmatmul.mubr.f32.gmra.mxu0 %v165
    %v264 = vpop.f32.mrf.mxu0
    %v265 = vadd.f32 %v187, %v264
    %v266 = vpop.f32.mrf.mxu0
    %267 = vmatprep.mubr.f32.mxu0 0.0
    %268 = vmatmul.mubr.f32.gmra.mxu0 %v166
    %v269 = vpop.f32.mrf.mxu0
    %v270 = vadd.f32 %v187, %v269
    %v271 = vpop.f32.mrf.mxu0
    %272 = vdwg.mxu0
    %v273 = vld [vmem:[#allocation8] sm:$0xff]
    %vm274 = vcmp.ne.s32.totalorder %v273, 4294967295
    %v275 = vshra.s32 %v62, 2
    %v276 = vshll.u32 %v275, 4
    %v277 = vlaneseq
    %v278 = vand.u32 %v277, 127
    %v279 = vadd.s32 %v276, %v273
    %280 = vset.pattern.permute.xlu0 0
    %281 = vperm.xlu0 %280, %v279
    %v282 = vpop.permute.xlu0 %281
    %vm283 = vcmp.eq.s32.totalorder %v278, %v282
    %v284 = vsel %vm274, 1, 0
    %285 = vset.pattern.permute.xlu0 0
    %286 = vperm.xlu0 %285, %v284
    %v287 = vpop.permute.xlu0 %286
    %vm288 = vcmp.eq.s32.totalorder %v287, 1
    %vm289 = vmand %vm283, %vm288
    %v290 = vsel %vm289, 1, 0
    %v291 = vcvt.s32.f32 %v290
    %v293 = vsel %vm152, %v291, 0
    %295 = vmatprep.subr.mxu0 0.0
    %296 = vmatpush1.msra.mxu0 0.0
    %297 = vmatprep.subr.mxu0 0.0
    %298 = vmatpush1.msra.mxu0 0.0
    %299 = vmatprep.subr.mxu0 0.0
    %300 = vmatpush1.msra.mxu0 0.0
    %301 = vmatprep.subr.mxu0 0.0
    %302 = vmatpush1.msra.mxu0 0.0
    %303 = vmatprep.subr.mxu0 0.0
    %304 = vmatpush1.msra.mxu0 0.0
    %305 = vmatprep.subr.mxu0 0.0
    %306 = vmatpush1.msra.mxu0 0.0
    %307 = vmatprep.subr.mxu0 0.0
    %308 = vmatpush1.msra.mxu0 0.0
    %309 = vmatprep.subr.mxu0 0.0
    %310 = vmatpush1.msra.mxu0 0.0
    %311 = vmatprep.subr.mxu0 0.0
    %312 = vmatpush1.msra.mxu0 0.0
    %313 = vmatprep.subr.mxu0 0.0
    %314 = vmatpush1.msra.mxu0 0.0
    %315 = vmatprep.subr.mxu0 0.0
    %316 = vmatpush1.msra.mxu0 0.0
    %317 = vmatprep.subr.mxu0 0.0
    %318 = vmatpush1.msra.mxu0 0.0
    %319 = vmatprep.subr.mxu0 0.0
    %320 = vmatpush1.msra.mxu0 %v270
    %321 = vmatprep.subr.mxu0 0.0
    %322 = vmatpush1.msra.mxu0 %v265
    %323 = vmatprep.subr.mxu0 0.0
    %324 = vmatpush1.msra.mxu0 %v260
    %325 = vmatprep.subr.mxu0 0.0
    %326 = vmatpush1.msra.mxu0 %v255
    %327 = vmatprep.subr.mxu0 0.0
    %328 = vmatpush2.msra.mxu0 0.0
    %329 = vmatprep.subr.mxu0 0.0
    %330 = vmatpush2.msra.mxu0 0.0
    %331 = vmatprep.subr.mxu0 0.0
    %332 = vmatpush2.msra.mxu0 0.0
    %333 = vmatprep.subr.mxu0 0.0
    %334 = vmatpush2.msra.mxu0 0.0
    %335 = vmatprep.subr.mxu0 0.0
    %336 = vmatpush2.msra.mxu0 0.0
    %337 = vmatprep.subr.mxu0 0.0
    %338 = vmatpush2.msra.mxu0 0.0
    %339 = vmatprep.subr.mxu0 0.0
    %340 = vmatpush2.msra.mxu0 0.0
    %341 = vmatprep.subr.mxu0 0.0
    %342 = vmatpush2.msra.mxu0 0.0
    %343 = vmatprep.subr.mxu0 0.0
    %344 = vmatpush2.msra.mxu0 0.0
    %345 = vmatprep.subr.mxu0 0.0
    %346 = vmatpush2.msra.mxu0 0.0
    %347 = vmatprep.subr.mxu0 0.0
    %348 = vmatpush2.msra.mxu0 0.0
    %349 = vmatprep.subr.mxu0 0.0
    %350 = vmatpush2.msra.mxu0 0.0
    %351 = vmatprep.subr.mxu0 0.0
    %352 = vmatpush2.msra.mxu0 0.0
    %353 = vmatprep.subr.mxu0 0.0
    %354 = vmatpush2.msra.mxu0 0.0
    %355 = vmatprep.subr.mxu0 0.0
    %356 = vmatpush2.msra.mxu0 0.0
    %357 = vmatprep.subr.mxu0 0.0
    %358 = vmatpush2.msra.mxu0 0.0
    %359 = vmatprep.mubr.f32.mxu0 0.0
    %360 = vmatmul.mubr.f32.gmra.mxu0 %v293
    %v361 = vpop.f32.mrf.mxu0
    %v362 = vadd.f32 0.0, %v361
    %v363 = vpop.f32.mrf.mxu0
    %364 = vdwg.mxu0
    %365 = vset.pattern.permute.xlu0 1
    %366 = vperm.xlu0 %365, %v279
    %v367 = vpop.permute.xlu0 %366
    %vm368 = vcmp.eq.s32.totalorder %v278, %v367
    %vm369 = vmand %vm368, %vm288
    %v370 = vsel %vm369, 1, 0
    %v371 = vcvt.s32.f32 %v370
    %v373 = vsel %vm152, %v371, 0
    %375 = vmatprep.subr.mxu0 0.0
    %376 = vmatpush1.msra.mxu0 0.0
    %377 = vmatprep.subr.mxu0 0.0
    %378 = vmatpush1.msra.mxu0 0.0
    %379 = vmatprep.subr.mxu0 0.0
    %380 = vmatpush1.msra.mxu0 0.0
    %381 = vmatprep.subr.mxu0 0.0
    %382 = vmatpush1.msra.mxu0 0.0
    %383 = vmatprep.subr.mxu0 0.0
    %384 = vmatpush1.msra.mxu0 0.0
    %385 = vmatprep.subr.mxu0 0.0
    %386 = vmatpush1.msra.mxu0 0.0
    %387 = vmatprep.subr.mxu0 0.0
    %388 = vmatpush1.msra.mxu0 0.0
    %389 = vmatprep.subr.mxu0 0.0
    %390 = vmatpush1.msra.mxu0 0.0
    %391 = vmatprep.subr.mxu0 0.0
    %392 = vmatpush1.msra.mxu0 0.0
    %393 = vmatprep.subr.mxu0 0.0
    %394 = vmatpush1.msra.mxu0 0.0
    %395 = vmatprep.subr.mxu0 0.0
    %396 = vmatpush1.msra.mxu0 0.0
    %397 = vmatprep.subr.mxu0 0.0
    %398 = vmatpush1.msra.mxu0 0.0
    %399 = vmatprep.subr.mxu0 0.0
    %400 = vmatpush1.msra.mxu0 %v270
    %401 = vmatprep.subr.mxu0 0.0
    %402 = vmatpush1.msra.mxu0 %v265
    %403 = vmatprep.subr.mxu0 0.0
    %404 = vmatpush1.msra.mxu0 %v260
    %405 = vmatprep.subr.mxu0 0.0
    %406 = vmatpush1.msra.mxu0 %v255
    %407 = vmatprep.subr.mxu0 0.0
    %408 = vmatpush2.msra.mxu0 0.0
    %409 = vmatprep.subr.mxu0 0.0
    %410 = vmatpush2.msra.mxu0 0.0
    %411 = vmatprep.subr.mxu0 0.0
    %412 = vmatpush2.msra.mxu0 0.0
    %413 = vmatprep.subr.mxu0 0.0
    %414 = vmatpush2.msra.mxu0 0.0
    %415 = vmatprep.subr.mxu0 0.0
    %416 = vmatpush2.msra.mxu0 0.0
    %417 = vmatprep.subr.mxu0 0.0
    %418 = vmatpush2.msra.mxu0 0.0
    %419 = vmatprep.subr.mxu0 0.0
    %420 = vmatpush2.msra.mxu0 0.0
    %421 = vmatprep.subr.mxu0 0.0
    %422 = vmatpush2.msra.mxu0 0.0
    %423 = vmatprep.subr.mxu0 0.0
    %424 = vmatpush2.msra.mxu0 0.0
    %425 = vmatprep.subr.mxu0 0.0
    %426 = vmatpush2.msra.mxu0 0.0
    %427 = vmatprep.subr.mxu0 0.0
    %428 = vmatpush2.msra.mxu0 0.0
    %429 = vmatprep.subr.mxu0 0.0
    %430 = vmatpush2.msra.mxu0 0.0
    %431 = vmatprep.subr.mxu0 0.0
    %432 = vmatpush2.msra.mxu0 0.0
    %433 = vmatprep.subr.mxu0 0.0
    %434 = vmatpush2.msra.mxu0 0.0
    %435 = vmatprep.subr.mxu0 0.0
    %436 = vmatpush2.msra.mxu0 0.0
    %437 = vmatprep.subr.mxu0 0.0
    %438 = vmatpush2.msra.mxu0 0.0
    %439 = vmatprep.mubr.f32.mxu0 0.0
    %440 = vmatmul.mubr.f32.gmra.mxu0 %v373
    %v441 = vpop.f32.mrf.mxu0
    %v442 = vadd.f32 0.0, %v441
    %v443 = vpop.f32.mrf.mxu0
    %444 = vdwg.mxu0
    %445 = vset.pattern.permute.xlu0 2
    %446 = vperm.xlu0 %445, %v279
    %v447 = vpop.permute.xlu0 %446
    %vm448 = vcmp.eq.s32.totalorder %v278, %v447
    %vm449 = vmand %vm448, %vm288
    %v450 = vsel %vm449, 1, 0
    %v451 = vcvt.s32.f32 %v450
    %v453 = vsel %vm152, %v451, 0
    %455 = vmatprep.subr.mxu0 0.0
    %456 = vmatpush1.msra.mxu0 0.0
    %457 = vmatprep.subr.mxu0 0.0
    %458 = vmatpush1.msra.mxu0 0.0
    %459 = vmatprep.subr.mxu0 0.0
    %460 = vmatpush1.msra.mxu0 0.0
    %461 = vmatprep.subr.mxu0 0.0
    %462 = vmatpush1.msra.mxu0 0.0
    %463 = vmatprep.subr.mxu0 0.0
    %464 = vmatpush1.msra.mxu0 0.0
    %465 = vmatprep.subr.mxu0 0.0
    %466 = vmatpush1.msra.mxu0 0.0
    %467 = vmatprep.subr.mxu0 0.0
    %468 = vmatpush1.msra.mxu0 0.0
    %469 = vmatprep.subr.mxu0 0.0
    %470 = vmatpush1.msra.mxu0 0.0
    %471 = vmatprep.subr.mxu0 0.0
    %472 = vmatpush1.msra.mxu0 0.0
    %473 = vmatprep.subr.mxu0 0.0
    %474 = vmatpush1.msra.mxu0 0.0
    %475 = vmatprep.subr.mxu0 0.0
    %476 = vmatpush1.msra.mxu0 0.0
    %477 = vmatprep.subr.mxu0 0.0
    %478 = vmatpush1.msra.mxu0 0.0
    %479 = vmatprep.subr.mxu0 0.0
    %480 = vmatpush1.msra.mxu0 %v270
    %481 = vmatprep.subr.mxu0 0.0
    %482 = vmatpush1.msra.mxu0 %v265
    %483 = vmatprep.subr.mxu0 0.0
    %484 = vmatpush1.msra.mxu0 %v260
    %485 = vmatprep.subr.mxu0 0.0
    %486 = vmatpush1.msra.mxu0 %v255
    %487 = vmatprep.subr.mxu0 0.0
    %488 = vmatpush2.msra.mxu0 0.0
    %489 = vmatprep.subr.mxu0 0.0
    %490 = vmatpush2.msra.mxu0 0.0
    %491 = vmatprep.subr.mxu0 0.0
    %492 = vmatpush2.msra.mxu0 0.0
    %493 = vmatprep.subr.mxu0 0.0
    %494 = vmatpush2.msra.mxu0 0.0
    %495 = vmatprep.subr.mxu0 0.0
    %496 = vmatpush2.msra.mxu0 0.0
    %497 = vmatprep.subr.mxu0 0.0
    %498 = vmatpush2.msra.mxu0 0.0
    %499 = vmatprep.subr.mxu0 0.0
    %500 = vmatpush2.msra.mxu0 0.0
    %501 = vmatprep.subr.mxu0 0.0
    %502 = vmatpush2.msra.mxu0 0.0
    %503 = vmatprep.subr.mxu0 0.0
    %504 = vmatpush2.msra.mxu0 0.0
    %505 = vmatprep.subr.mxu0 0.0
    %506 = vmatpush2.msra.mxu0 0.0
    %507 = vmatprep.subr.mxu0 0.0
    %508 = vmatpush2.msra.mxu0 0.0
    %509 = vmatprep.subr.mxu0 0.0
    %510 = vmatpush2.msra.mxu0 0.0
    %511 = vmatprep.subr.mxu0 0.0
    %512 = vmatpush2.msra.mxu0 0.0
    %513 = vmatprep.subr.mxu0 0.0
    %514 = vmatpush2.msra.mxu0 0.0
    %515 = vmatprep.subr.mxu0 0.0
    %516 = vmatpush2.msra.mxu0 0.0
    %517 = vmatprep.subr.mxu0 0.0
    %518 = vmatpush2.msra.mxu0 0.0
    %519 = vmatprep.mubr.f32.mxu0 0.0
    %520 = vmatmul.mubr.f32.gmra.mxu0 %v453
    %v521 = vpop.f32.mrf.mxu0
    %v522 = vadd.f32 0.0, %v521
    %v523 = vpop.f32.mrf.mxu0
    %524 = vdwg.mxu0
    %525 = vset.pattern.permute.xlu0 3
    %526 = vperm.xlu0 %525, %v279
    %v527 = vpop.permute.xlu0 %526
    %vm528 = vcmp.eq.s32.totalorder %v278, %v527
    %vm529 = vmand %vm528, %vm288
    %v530 = vsel %vm529, 1, 0
    %v531 = vcvt.s32.f32 %v530
    %v533 = vsel %vm152, %v531, 0
    %535 = vmatprep.subr.mxu0 0.0
    %536 = vmatpush1.msra.mxu0 0.0
    %537 = vmatprep.subr.mxu0 0.0
    %538 = vmatpush1.msra.mxu0 0.0
    %539 = vmatprep.subr.mxu0 0.0
    %540 = vmatpush1.msra.mxu0 0.0
    %541 = vmatprep.subr.mxu0 0.0
    %542 = vmatpush1.msra.mxu0 0.0
    %543 = vmatprep.subr.mxu0 0.0
    %544 = vmatpush1.msra.mxu0 0.0
    %545 = vmatprep.subr.mxu0 0.0
    %546 = vmatpush1.msra.mxu0 0.0
    %547 = vmatprep.subr.mxu0 0.0
    %548 = vmatpush1.msra.mxu0 0.0
    %549 = vmatprep.subr.mxu0 0.0
    %550 = vmatpush1.msra.mxu0 0.0
    %551 = vmatprep.subr.mxu0 0.0
    %552 = vmatpush1.msra.mxu0 0.0
    %553 = vmatprep.subr.mxu0 0.0
    %554 = vmatpush1.msra.mxu0 0.0
    %555 = vmatprep.subr.mxu0 0.0
    %556 = vmatpush1.msra.mxu0 0.0
    %557 = vmatprep.subr.mxu0 0.0
    %558 = vmatpush1.msra.mxu0 0.0
    %559 = vmatprep.subr.mxu0 0.0
    %560 = vmatpush1.msra.mxu0 %v270
    %561 = vmatprep.subr.mxu0 0.0
    %562 = vmatpush1.msra.mxu0 %v265
    %563 = vmatprep.subr.mxu0 0.0
    %564 = vmatpush1.msra.mxu0 %v260
    %565 = vmatprep.subr.mxu0 0.0
    %566 = vmatpush1.msra.mxu0 %v255
    %567 = vmatprep.subr.mxu0 0.0
    %568 = vmatpush2.msra.mxu0 0.0
    %569 = vmatprep.subr.mxu0 0.0
    %570 = vmatpush2.msra.mxu0 0.0
    %571 = vmatprep.subr.mxu0 0.0
    %572 = vmatpush2.msra.mxu0 0.0
    %573 = vmatprep.subr.mxu0 0.0
    %574 = vmatpush2.msra.mxu0 0.0
    %575 = vmatprep.subr.mxu0 0.0
    %576 = vmatpush2.msra.mxu0 0.0
    %577 = vmatprep.subr.mxu0 0.0
    %578 = vmatpush2.msra.mxu0 0.0
    %579 = vmatprep.subr.mxu0 0.0
    %580 = vmatpush2.msra.mxu0 0.0
    %581 = vmatprep.subr.mxu0 0.0
    %582 = vmatpush2.msra.mxu0 0.0
    %583 = vmatprep.subr.mxu0 0.0
    %584 = vmatpush2.msra.mxu0 0.0
    %585 = vmatprep.subr.mxu0 0.0
    %586 = vmatpush2.msra.mxu0 0.0
    %587 = vmatprep.subr.mxu0 0.0
    %588 = vmatpush2.msra.mxu0 0.0
    %589 = vmatprep.subr.mxu0 0.0
    %590 = vmatpush2.msra.mxu0 0.0
    %591 = vmatprep.subr.mxu0 0.0
    %592 = vmatpush2.msra.mxu0 0.0
    %593 = vmatprep.subr.mxu0 0.0
    %594 = vmatpush2.msra.mxu0 0.0
    %595 = vmatprep.subr.mxu0 0.0
    %596 = vmatpush2.msra.mxu0 0.0
    %597 = vmatprep.subr.mxu0 0.0
    %598 = vmatpush2.msra.mxu0 0.0
    %599 = vmatprep.mubr.f32.mxu0 0.0
    %600 = vmatmul.mubr.f32.gmra.mxu0 %v533
    %v601 = vpop.f32.mrf.mxu0
    %v602 = vadd.f32 0.0, %v601
    %v603 = vpop.f32.mrf.mxu0
    %604 = vdwg.mxu0
    %606 = vrot.lane.b32.xlu0 %v442, 32
    %v607 = vpop.permute.xlu0 %606
    %610 = vrot.lane.b32.xlu0 %v522, 32
    %v611 = vpop.permute.xlu0 %610
    %614 = vrot.lane.b32.xlu0 %v602, 64
    %v615 = vpop.permute.xlu0 %614
    %v617 = vsel %vm152, %v362, %v607
    %v618 = vsel %vm157, %v617, %v611
    %v619 = vsel %vm162, %v618, %v615
    %v620 = vld [vmem:[#allocation6 + $0xa1] sm:$0x1]
    %v621 = vlaneseq
    %v622 = vshrl.u32 %v621, 7
    %v623 = vsub.s32 0, %v622
    %v624 = vrot.slane %v620, %v623
    %641 = vrot.lane.b32.xlu0 %v167, 64
    %v642 = vpop.permute.xlu0 %641
    %643 = vrot.lane.b32.xlu0 %v168, 64
    %v644 = vpop.permute.xlu0 %643
    %645 = vrot.lane.b32.xlu0 %v169, 64
    %v646 = vpop.permute.xlu0 %645
    %647 = vrot.lane.b32.xlu0 %v170, 64
    %v648 = vpop.permute.xlu0 %647
    %649 = vrot.lane.b32.xlu0 %v171, 64
    %v650 = vpop.permute.xlu0 %649
    %651 = vrot.lane.b32.xlu0 %v172, 64
    %v652 = vpop.permute.xlu0 %651
    %653 = vrot.lane.b32.xlu0 %v173, 64
    %v654 = vpop.permute.xlu0 %653
    %655 = vrot.lane.b32.xlu0 %v174, 64
    %v656 = vpop.permute.xlu0 %655
    %657 = vrot.lane.b32.xlu0 %v175, 64
    %v658 = vpop.permute.xlu0 %657
    %659 = vrot.lane.b32.xlu0 %v176, 64
    %v660 = vpop.permute.xlu0 %659
    %661 = vrot.lane.b32.xlu0 %v177, 64
    %v662 = vpop.permute.xlu0 %661
    %663 = vrot.lane.b32.xlu0 %v178, 64
    %v664 = vpop.permute.xlu0 %663
    %665 = vrot.lane.b32.xlu0 %v179, 64
    %v666 = vpop.permute.xlu0 %665
    %667 = vrot.lane.b32.xlu0 %v180, 64
    %v668 = vpop.permute.xlu0 %667
    %669 = vrot.lane.b32.xlu0 %v181, 64
    %v670 = vpop.permute.xlu0 %669
    %671 = vrot.lane.b32.xlu0 %v182, 64
    %v672 = vpop.permute.xlu0 %671
    %689 = vmatprep.subr.mxu0 0.0
    %690 = vmatpush1.msra.mxu0 %v672
    %691 = vmatprep.subr.mxu0 0.0
    %692 = vmatpush1.msra.mxu0 %v670
    %693 = vmatprep.subr.mxu0 0.0
    %694 = vmatpush1.msra.mxu0 %v668
    %695 = vmatprep.subr.mxu0 0.0
    %696 = vmatpush1.msra.mxu0 %v666
    %697 = vmatprep.subr.mxu0 0.0
    %698 = vmatpush1.msra.mxu0 %v664
    %699 = vmatprep.subr.mxu0 0.0
    %700 = vmatpush1.msra.mxu0 %v662
    %701 = vmatprep.subr.mxu0 0.0
    %702 = vmatpush1.msra.mxu0 %v660
    %703 = vmatprep.subr.mxu0 0.0
    %704 = vmatpush1.msra.mxu0 %v658
    %705 = vmatprep.subr.mxu0 0.0
    %706 = vmatpush1.msra.mxu0 %v656
    %707 = vmatprep.subr.mxu0 0.0
    %708 = vmatpush1.msra.mxu0 %v654
    %709 = vmatprep.subr.mxu0 0.0
    %710 = vmatpush1.msra.mxu0 %v652
    %711 = vmatprep.subr.mxu0 0.0
    %712 = vmatpush1.msra.mxu0 %v650
    %713 = vmatprep.subr.mxu0 0.0
    %714 = vmatpush1.msra.mxu0 %v648
    %715 = vmatprep.subr.mxu0 0.0
    %716 = vmatpush1.msra.mxu0 %v646
    %717 = vmatprep.subr.mxu0 0.0
    %718 = vmatpush1.msra.mxu0 %v644
    %719 = vmatprep.subr.mxu0 0.0
    %720 = vmatpush1.msra.mxu0 %v642
    %721 = vmatprep.subr.mxu0 0.0
    %722 = vmatpush2.msra.mxu0 0.0
    %723 = vmatprep.subr.mxu0 0.0
    %724 = vmatpush2.msra.mxu0 0.0
    %725 = vmatprep.subr.mxu0 0.0
    %726 = vmatpush2.msra.mxu0 0.0
    %727 = vmatprep.subr.mxu0 0.0
    %728 = vmatpush2.msra.mxu0 0.0
    %729 = vmatprep.subr.mxu0 0.0
    %730 = vmatpush2.msra.mxu0 0.0
    %731 = vmatprep.subr.mxu0 0.0
    %732 = vmatpush2.msra.mxu0 0.0
    %733 = vmatprep.subr.mxu0 0.0
    %734 = vmatpush2.msra.mxu0 0.0
    %735 = vmatprep.subr.mxu0 0.0
    %736 = vmatpush2.msra.mxu0 0.0
    %737 = vmatprep.subr.mxu0 0.0
    %738 = vmatpush2.msra.mxu0 0.0
    %739 = vmatprep.subr.mxu0 0.0
    %740 = vmatpush2.msra.mxu0 0.0
    %741 = vmatprep.subr.mxu0 0.0
    %742 = vmatpush2.msra.mxu0 0.0
    %743 = vmatprep.subr.mxu0 0.0
    %744 = vmatpush2.msra.mxu0 0.0
    %745 = vmatprep.subr.mxu0 0.0
    %746 = vmatpush2.msra.mxu0 0.0
    %747 = vmatprep.subr.mxu0 0.0
    %748 = vmatpush2.msra.mxu0 0.0
    %749 = vmatprep.subr.mxu0 0.0
    %750 = vmatpush2.msra.mxu0 0.0
    %751 = vmatprep.subr.mxu0 0.0
    %752 = vmatpush2.msra.mxu0 0.0
    %753 = vmatprep.mubr.f32.mxu0 0.0
    %754 = vmatmul.mubr.f32.gmra.mxu0 %v619
    %v755 = vpop.f32.mrf.mxu0
    %v756 = vadd.f32 %v624, %v755
    %v757 = vpop.f32.mrf.mxu0
    %758 = vdwg.mxu0
    %v759 = vtanh.pop %v756
    %v760 = vsel %vm152, %v759, 0.0
    %761 = vadd.xlane.f32.xlu0 %v760
    %v762 = vpop.xlane.xlu0 %761
    %v763 = vrcp.pop 32.0
    %v764 = vmul.f32 %v762, %v763
    %v765 = vsub.f32 %v759, %v764
    %v766 = vmul.f32 %v765, %v765
    %v767 = vsel %vm152, %v766, 0.0
    %768 = vadd.xlane.f32.xlu0 %v767
    %v769 = vpop.xlane.xlu0 %768
    %v770 = vmul.f32 %v769, %v763
    %v771 = vadd.f32 %v770, 1e-05
    %v772 = vrsqrt.pop %v771
    %v773 = vmul.f32 %v765, %v772
    %v774 = vld [vmem:[#allocation6 + $0xa2] sm:$0x1]
    %v775 = vlaneseq
    %v776 = vshrl.u32 %v775, 7
    %v777 = vsub.s32 0, %v776
    %v778 = vrot.slane %v774, %v777
    %v779 = vmul.f32 %v773, %v778
    %v780 = vld [vmem:[#allocation6 + $0xa3] sm:$0x1]
    %v781 = vlaneseq
    %v782 = vshrl.u32 %v781, 7
    %v783 = vsub.s32 0, %v782
    %v784 = vrot.slane %v780, %v783
    %v785 = vadd.f32 %v779, %v784
    %v786 = vld [vmem:[#allocation6 + $0x80] sm:$0xff]
    %v787 = vld [vmem:[#allocation6 + $0x88] sm:$0xff]
    %v788 = vld [vmem:[#allocation6 + $0x90] sm:$0xff]
    %v789 = vld [vmem:[#allocation6 + $0x98] sm:$0xff]
    %v790 = vld [vmem:[#allocation6 + $0xa4] sm:$0x1]
    %v791 = vlaneseq
    %v792 = vshrl.u32 %v791, 7
    %v793 = vsub.s32 0, %v792
    %v794 = vrot.slane %v790, %v793
    %v796 = vsel %vm152, %v785, 0
    %798 = vmatprep.subr.mxu0 0.0
    %799 = vmatpush1.msra.mxu0 0.0
    %800 = vmatprep.subr.mxu0 0.0
    %801 = vmatpush1.msra.mxu0 0.0
    %802 = vmatprep.subr.mxu0 0.0
    %803 = vmatpush1.msra.mxu0 0.0
    %804 = vmatprep.subr.mxu0 0.0
    %805 = vmatpush1.msra.mxu0 0.0
    %806 = vmatprep.subr.mxu0 0.0
    %807 = vmatpush1.msra.mxu0 0.0
    %808 = vmatprep.subr.mxu0 0.0
    %809 = vmatpush1.msra.mxu0 0.0
    %810 = vmatprep.subr.mxu0 0.0
    %811 = vmatpush1.msra.mxu0 0.0
    %812 = vmatprep.subr.mxu0 0.0
    %813 = vmatpush1.msra.mxu0 0.0
    %814 = vmatprep.subr.mxu0 0.0
    %815 = vmatpush1.msra.mxu0 0.0
    %816 = vmatprep.subr.mxu0 0.0
    %817 = vmatpush1.msra.mxu0 0.0
    %818 = vmatprep.subr.mxu0 0.0
    %819 = vmatpush1.msra.mxu0 0.0
    %820 = vmatprep.subr.mxu0 0.0
    %821 = vmatpush1.msra.mxu0 0.0
    %822 = vmatprep.subr.mxu0 0.0
    %823 = vmatpush1.msra.mxu0 %v789
    %824 = vmatprep.subr.mxu0 0.0
    %825 = vmatpush1.msra.mxu0 %v788
    %826 = vmatprep.subr.mxu0 0.0
    %827 = vmatpush1.msra.mxu0 %v787
    %828 = vmatprep.subr.mxu0 0.0
    %829 = vmatpush1.msra.mxu0 %v786
    %830 = vmatprep.subr.mxu0 0.0
    %831 = vmatpush2.msra.mxu0 0.0
    %832 = vmatprep.subr.mxu0 0.0
    %833 = vmatpush2.msra.mxu0 0.0
    %834 = vmatprep.subr.mxu0 0.0
    %835 = vmatpush2.msra.mxu0 0.0
    %836 = vmatprep.subr.mxu0 0.0
    %837 = vmatpush2.msra.mxu0 0.0
    %838 = vmatprep.subr.mxu0 0.0
    %839 = vmatpush2.msra.mxu0 0.0
    %840 = vmatprep.subr.mxu0 0.0
    %841 = vmatpush2.msra.mxu0 0.0
    %842 = vmatprep.subr.mxu0 0.0
    %843 = vmatpush2.msra.mxu0 0.0
    %844 = vmatprep.subr.mxu0 0.0
    %845 = vmatpush2.msra.mxu0 0.0
    %846 = vmatprep.subr.mxu0 0.0
    %847 = vmatpush2.msra.mxu0 0.0
    %848 = vmatprep.subr.mxu0 0.0
    %849 = vmatpush2.msra.mxu0 0.0
    %850 = vmatprep.subr.mxu0 0.0
    %851 = vmatpush2.msra.mxu0 0.0
    %852 = vmatprep.subr.mxu0 0.0
    %853 = vmatpush2.msra.mxu0 0.0
    %854 = vmatprep.subr.mxu0 0.0
    %855 = vmatpush2.msra.mxu0 0.0
    %856 = vmatprep.subr.mxu0 0.0
    %857 = vmatpush2.msra.mxu0 0.0
    %858 = vmatprep.subr.mxu0 0.0
    %859 = vmatpush2.msra.mxu0 0.0
    %860 = vmatprep.subr.mxu0 0.0
    %861 = vmatpush2.msra.mxu0 0.0
    %862 = vmatprep.mubr.f32.mxu0 0.0
    %863 = vmatmul.mubr.f32.gmra.mxu0 %v796
    %v864 = vpop.f32.mrf.mxu0
    %v865 = vadd.f32 %v794, %v864
    %v866 = vpop.f32.mrf.mxu0
    %867 = vdwg.mxu0
    %868 = vst [vmem:[#allocation9] sm:$0xff] %v865
    %v869 = vmax.f32 %v865, 0.0
    %870 = vrot.lane.b32.xlu0 %v273, 124
    %v871 = vpop.permute.xlu0 %870
    %v873 = vmul.f32 %v865, %v871
    %v874 = vsub.f32 %v869, %v873
    %v875 = vand.u32 2147483647, %v865
    %v876 = vsub.f32 0.0, %v875
    %v877 = vmul.f32 %v876, 1.442695
    %v878 = vpow.pop %v877
    %v879 = vadd.f32 %v878, 1.0
    %v880 = vlog2.pop %v879
    %v881 = vmul.f32 %v880, 0.6931472
    %v882 = vmul.f32 -0.5, %v878
    %v883 = vadd.f32 %v882, 1.0
    %v884 = vmul.f32 %v883, %v878
    %v885 = vand.u32 2147483647, %v878
    %vm886 = vcmp.lt.f32.partialorder %v885, 0.0004427343
    %v887 = vsel %vm886, %v884, %v881
    %v888 = vadd.f32 %v874, %v887
    %v889 = vcvt.s32.f32 %v284
    %891 = vset.pattern.permute.xlu0 0
    %892 = vperm.xlu0 %891, %v889
    %v893 = vpop.permute.xlu0 %892
    %v895 = vmul.f32 %v888, %v893
    %vm896 = vcmask 23552
    %v897 = vsel %vm896, %v895, 0.0
    %898 = vadd.xlane.f32.xlu0 %v897
    %v899 = vpop.xlane.xlu0 %898
    %v900 = vrot.slane %v899, 4
    %v901 = vadd.f32 %v899, %v900
    %v902 = vrot.slane %v901, 2
    %v903 = vadd.f32 %v901, %v902
    %v904 = vrot.slane %v903, 1
    %v905 = vadd.f32 %v903, %v904
    %s906 = vtos %v905
    %vm907 = vcmask 7168
    %v908 = vsel %vm907, %v889, 0.0
    %909 = vadd.xlane.f32.xlu0 %v908
    %v910 = vpop.xlane.xlu0 %909
    %v911 = vrot.slane %v910, 4
    %v912 = vadd.f32 %v910, %v911
    %v913 = vrot.slane %v912, 2
    %v914 = vadd.f32 %v912, %v913
    %v915 = vrot.slane %v914, 1
    %v916 = vadd.f32 %v914, %v915
    %s917 = vtos %v916
    %s918 = smul.f32 %s917, 3.0
    %s919 = smax.f32 %s918, 1.0
    %v920 = vstv %s919
    %v921 = vrcp.pop %v920
    %s922 = vtos %v921
    %s923 = smul.f32 %s906, %s922
    %s924 = scalar_lea.smem [#allocation10], 0
    %925 = sst [smem:[%s924]] %s923
    // Predicated region
    $region26: #{tpu_custom_call.1} parent=1 // pred_check
      _
    $region27: #{tpu_custom_call.1} parent=1 // pred_check_branch
      %927 = sbr.rel (0) target = $region29
    $region28: #{tpu_custom_call.1} parent=1 // pred_region
      %s929 = ssub.s32 128, 128
      %930 = vsyncadd [#allocation4], %s929
      %s932 = sshll.u32 [#allocation9], 4
      %s933 = int_to_ptr.vmem [resolvable:$true] %s932
      %935 = dma.vmem_to_hbm [thread:$0]  %s933, 128, %s3, [#allocation4]
    $region29: #{tpu_custom_call.1} parent=1 // pred_fallthru
      _
    // Predicated region
    $region30: #{tpu_custom_call.1} parent=1 // pred_check
      _
    $region31: #{tpu_custom_call.1} parent=1 // pred_check_branch
      %937 = sbr.rel (0) target = $region33
    $region32: #{tpu_custom_call.1} parent=1 // pred_region
      %s939 = ssub.s32 16, 16
      %940 = vsyncadd [#allocation5], %s939
      %943 = dma.smem_to_hbm [#allocation10], 16, %s4, [#allocation5]
    $region33: #{tpu_custom_call.1} parent=1 // pred_fallthru
      _
    // Predicated region
    $region34: #{tpu_custom_call.1} parent=1 // pred_check
      _
    $region35: #{tpu_custom_call.1} parent=1 // pred_check_branch
      %945 = sbr.rel (0) target = $region37
    $region36: #{tpu_custom_call.1} parent=1 // pred_region
      %946 = dma.done [#allocation4], 128
    $region37: #{tpu_custom_call.1} parent=1 // pred_fallthru
      _
    // Predicated region
    $region38: #{tpu_custom_call.1} parent=1 // pred_check
      _
    $region39: #{tpu_custom_call.1} parent=1 // pred_check_branch
      %948 = sbr.rel (0) target = $region41
    $region40: #{tpu_custom_call.1} parent=1 // pred_region
      %949 = dma.done [#allocation5], 16
    $region41: #{tpu_custom_call.1} parent=1 // pred_fallthru
      _
    %950 = sfence
    %951 = vsyncpa [#allocation3], 1
    %952 = vsyncpa [#allocation7], 1
    %953 = vsyncpa [#allocation4], 1
    %954 = vsyncpa [#allocation5], 1

</llo_original>
